<compile_context>
chip_gen: v7x
topology: tpu7x:2x2x1
jax: 0.10.0
libtpu: 0.0.40
codegen_flags: <defaults>
</compile_context>

<pallas_src>
import jax
import jax.numpy as jnp
from jax.experimental import pallas as pl
from jax.experimental.pallas import tpu as pltpu


def _lstm_seq_kernel(mask_ref, x_ref, wih_ref, whh_ref, b_ref,
                     y_ref, hn_ref, cn_ref):
    """Whole-sequence LSTM recurrence in one kernel invocation.

    mask_ref : (T*Bp, H)   f32  1.0 where t < lengths[b], else 0.0 (row-aligned
                                with x/gx rows, pre-broadcast to H lanes)
    x_ref    : (T*Bp, D)   f32  inputs, time-major, batch padded to 8 sublanes
    wih_ref  : (D, 4H)     f32  W_ih^T
    whh_ref  : (H, 4H)     f32  W_hh^T
    b_ref    : (1, 4H)     f32  b_ih + b_hh
    y_ref    : (T*Bp, H)   f32  padded outputs (reshaped to (T,Bp,H) outside)
    hn_ref   : (Bp, H)     f32  final hidden state
    cn_ref   : (Bp, H)     f32  final cell state
    """
    Bp, H = hn_ref.shape
    T = y_ref.shape[0] // Bp

    # Hoisted input projection: one batched MXU pass over all T*Bp rows,
    # bias fused once (not per step).
    gx = jnp.dot(x_ref[...], wih_ref[...],
                 preferred_element_type=jnp.float32) + b_ref[...]   # (T*Bp,4H)

    whh = whh_ref[...]                                   # (H, 4H) f32
    # Hoisted packed-sequence validity mask: one compare for the whole
    # sequence; per-step use is a static sublane slice (no broadcast, no cmp).
    valid_all = mask_ref[...] != 0.0                     # (T*Bp, H) bool

    h = jnp.zeros((Bp, H), jnp.float32)
    c = jnp.zeros((Bp, H), jnp.float32)
    ys = []

    # T is small and static -> fully unrolled recurrence; each step is one
    # tiny recurrent matmul plus VPU/EUP gate math.
    # TODO(synk): hold W_hh^T in the MXU weight-staging registers across the
    # recurrence (pltpu.matmul_push_rhs / matmul_acc_lhs / matmul_pop, and on
    # v7x pre-load the MRB accumulator with the gx slice) instead of jnp.dot
    # re-pushing the (H,4H) RHS every step.
    # TODO(synk): for T beyond ~16-32, switch to lax.fori_loop(unroll=k) or a
    # time-chunked grid carrying h/c in VMEM scratch across "arbitrary" steps.
    # TODO(synk): for large B on v7x, add a parallel batch grid axis so both
    # TensorCores run independent batch shards.
    for t in range(T):
        lo = t * Bp
        gates = gx[lo:lo + Bp, :] + jnp.dot(
            h, whh, preferred_element_type=jnp.float32)            # (Bp, 4H)

        # Two full-vreg EUP passes; quarters via static lane slices.
        # PyTorch gate order: i, f, g, o.
        sg = jax.nn.sigmoid(gates)
        th = jnp.tanh(gates)
        i_g = sg[:, 0 * H:1 * H]
        f_g = sg[:, 1 * H:2 * H]
        g_g = th[:, 2 * H:3 * H]
        o_g = sg[:, 3 * H:4 * H]

        c_cand = f_g * c + i_g * g_g
        h_cand = o_g * jnp.tanh(c_cand)

        valid = valid_all[lo:lo + Bp, :]                 # (Bp, H) static slice
        c = jnp.where(valid, c_cand, c)
        h = jnp.where(valid, h_cand, h)
        # pad_packed_sequence pads invalid steps with 0; writeback deferred.
        ys.append(jnp.where(valid, h_cand, 0.0))

    # Single batched writeback, off the recurrence critical path.
    y_ref[...] = jnp.concatenate(ys, axis=0).astype(y_ref.dtype)
    hn_ref[...] = h.astype(hn_ref.dtype)
    cn_ref[...] = c.astype(cn_ref.dtype)


@jax.jit
def noise_rnn_forward(x, lengths, w_ih, w_hh, b_ih, b_hh):
    """Eval-mode NoiseRNN.forward: returns (y, (h_n, c_n)).

    TODO(synk): training-time weight noise (w_* + N(mean, std)) and the
    bidirectional / num_layers>1 / sum_directions variants are parameter-level
    glue around this same kernel (the bidirectional variant should fuse both
    directions' W_hh into one (H, 8H) RHS on v6e/v7x) and are not implemented.
    """
    T, B, D = x.shape
    H = w_hh.shape[1]

    # Pad batch to a multiple of 8 sublanes; padded rows get length 0 so they
    # stay zero and are sliced away below.
    Bp = max(8, ((B + 7) // 8) * 8)
    x_p = jnp.zeros((T, Bp, D), jnp.float32).at[:, :B, :].set(
        x.astype(jnp.float32))
    len_p = jnp.zeros((Bp,), jnp.int32).at[:B].set(lengths.astype(jnp.int32))

    x2d = x_p.reshape(T * Bp, D)
    wih_t = jnp.transpose(w_ih).astype(jnp.float32)      # (D, 4H)
    whh_t = jnp.transpose(w_hh).astype(jnp.float32)      # (H, 4H)
    bias = (b_ih + b_hh)[None, :].astype(jnp.float32)    # (1, 4H)

    # Hoisted validity mask, row-aligned with x2d/gx and pre-broadcast to H
    # lanes (one-time wrapper cost; removes per-step compare+broadcast).
    steps = jnp.arange(T, dtype=jnp.int32)
    valid = len_p[None, :] > steps[:, None]                       # (T, Bp)
    mask2d = jnp.broadcast_to(valid[:, :, None], (T, Bp, H)
                              ).reshape(T * Bp, H).astype(jnp.float32)

    vmem = pl.BlockSpec(memory_space=pltpu.MemorySpace.VMEM)

    y2d, h_n, c_n = pl.pallas_call(
        _lstm_seq_kernel,
        out_shape=(
            jax.ShapeDtypeStruct((T * Bp, H), jnp.float32),
            jax.ShapeDtypeStruct((Bp, H), jnp.float32),
            jax.ShapeDtypeStruct((Bp, H), jnp.float32),
        ),
        in_specs=[vmem, vmem, vmem, vmem, vmem],
        out_specs=(vmem, vmem, vmem),
    )(mask2d, x2d, wih_t, whh_t, bias)

    y = y2d.reshape(T, Bp, H)[:, :B, :]
    return y, (h_n[:B][None], c_n[:B][None])


def lstm_reference(x, lengths, w_ih, w_hh, b_ih, b_hh):
    """Pure-JAX f32 reference matching PyTorch LSTM + pack/pad semantics."""
    T, B, _ = x.shape
    H = w_hh.shape[1]
    hi = jax.lax.Precision.HIGHEST

    def step(carry, inp):
        h, c = carry
        x_t, t = inp
        gates = (jnp.dot(x_t, w_ih.T, precision=hi) + b_ih
                 + jnp.dot(h, w_hh.T, precision=hi) + b_hh)
        i, f, g, o = jnp.split(gates, 4, axis=-1)
        i, f, g, o = (jax.nn.sigmoid(i), jax.nn.sigmoid(f),
                      jnp.tanh(g), jax.nn.sigmoid(o))
        c_cand = f * c + i * g
        h_cand = o * jnp.tanh(c_cand)
        valid = (lengths > t)[:, None]
        c_new = jnp.where(valid, c_cand, c)
        h_new = jnp.where(valid, h_cand, h)
        y = jnp.where(valid, h_cand, 0.0)
        return (h_new, c_new), y

    (h_n, c_n), ys = jax.lax.scan(
        step, (jnp.zeros((B, H)), jnp.zeros((B, H))),
        (x, jnp.arange(T)))
    return ys, h_n[None], c_n[None]


if __name__ == "__main__":
    # Shapes consistent with NoiseRNN(input_size=16, hidden_size=32,
    # rnn_type=nn.LSTM, bidirectional=False, num_layers=1, weight_noise=None)
    T, B, D, H = 8, 2, 16, 32

    key = jax.random.PRNGKey(0)
    kx, k1, k2, k3, k4 = jax.random.split(key, 5)

    x = jax.random.normal(kx, (T, B, D), dtype=jnp.float32)
    # pack_padded_sequence expects descending lengths
    lengths = jnp.array([8, 5], dtype=jnp.int32)

    # PyTorch-style LSTM init: U(-1/sqrt(H), 1/sqrt(H))
    k = 1.0 / jnp.sqrt(jnp.float32(H))
    w_ih = jax.random.uniform(k1, (4 * H, D), minval=-k, maxval=k,
                              dtype=jnp.float32)
    w_hh = jax.random.uniform(k2, (4 * H, H), minval=-k, maxval=k,
                              dtype=jnp.float32)
    b_ih = jax.random.uniform(k3, (4 * H,), minval=-k, maxval=k,
                              dtype=jnp.float32)
    b_hh = jax.random.uniform(k4, (4 * H,), minval=-k, maxval=k,
                              dtype=jnp.float32)

    y, (h_n, c_n) = noise_rnn_forward(x, lengths, w_ih, w_hh, b_ih, b_hh)
    jax.block_until_ready((y, h_n, c_n))

    y_ref, hn_ref, cn_ref = lstm_reference(x, lengths, w_ih, w_hh, b_ih, b_hh)
    # Kernel keeps the whole datapath in f32; tolerance covers MXU-pass vs
    # HIGHEST-precision reference rounding differences over T=8 steps.
    assert jnp.allclose(y, y_ref, atol=5e-3, rtol=5e-3)
    assert jnp.allclose(h_n, hn_ref, atol=5e-3, rtol=5e-3)
    assert jnp.allclose(c_n, cn_ref, atol=5e-3, rtol=5e-3)

    print("KERNEL_OK")
</pallas_src>

<mosaic_0001>
module attributes {stable_mosaic.version = 11 : i64} {
  func.func @_lstm_seq_kernel(%arg0: memref<64x32xf32, #tpu.memory_space<vmem>>, %arg1: memref<64x16xf32, #tpu.memory_space<vmem>>, %arg2: memref<16x128xf32, #tpu.memory_space<vmem>>, %arg3: memref<32x128xf32, #tpu.memory_space<vmem>>, %arg4: memref<1x128xf32, #tpu.memory_space<vmem>>, %arg5: memref<64x32xf32, #tpu.memory_space<vmem>>, %arg6: memref<8x32xf32, #tpu.memory_space<vmem>>, %arg7: memref<8x32xf32, #tpu.memory_space<vmem>>) attributes {dimension_semantics = [], scalar_prefetch = 0 : i64, scratch_operands = 0 : i64, tpu.core_type = #tpu.core_type<tc>} {
    %c0 = arith.constant 0 : index
    %c0_0 = arith.constant 0 : index
    %0 = vector.load %arg1[%c0, %c0_0] : memref<64x16xf32, #tpu.memory_space<vmem>>, vector<64x16xf32>
    %c0_1 = arith.constant 0 : index
    %c0_2 = arith.constant 0 : index
    %1 = vector.load %arg2[%c0_1, %c0_2] : memref<16x128xf32, #tpu.memory_space<vmem>>, vector<16x128xf32>
    %cst = arith.constant dense<0.000000e+00> : vector<64x128xf32>
    %2 = tpu.matmul %0, %1, %cst {dimension_numbers = #tpu.dot_dimension_numbers<[1], [0], [0], [1], [0, 0, 1, 1], [], []>} : vector<64x16xf32>, vector<16x128xf32>, vector<64x128xf32> -> vector<64x128xf32>
    %c0_3 = arith.constant 0 : index
    %c0_4 = arith.constant 0 : index
    %3 = vector.load %arg4[%c0_3, %c0_4] : memref<1x128xf32, #tpu.memory_space<vmem>>, vector<1x128xf32>
    %4 = vector.broadcast %3 : vector<1x128xf32> to vector<64x128xf32>
    %5 = arith.addf %2, %4 : vector<64x128xf32>
    %c0_5 = arith.constant 0 : index
    %c0_6 = arith.constant 0 : index
    %6 = vector.load %arg3[%c0_5, %c0_6] : memref<32x128xf32, #tpu.memory_space<vmem>>, vector<32x128xf32>
    %c0_7 = arith.constant 0 : index
    %c0_8 = arith.constant 0 : index
    %7 = vector.load %arg0[%c0_7, %c0_8] : memref<64x32xf32, #tpu.memory_space<vmem>>, vector<64x32xf32>
    %cst_9 = arith.constant 0.000000e+00 : f32
    %8 = vector.broadcast %cst_9 : f32 to vector<64x32xf32>
    %9 = arith.cmpf one, %7, %8 : vector<64x32xf32>
    %cst_10 = arith.constant 0.000000e+00 : f32
    %10 = vector.broadcast %cst_10 : f32 to vector<8x32xf32>
    %cst_11 = arith.constant 0.000000e+00 : f32
    %11 = vector.broadcast %cst_11 : f32 to vector<8x32xf32>
    %12 = vector.extract_strided_slice %5 {offsets = [0, 0], sizes = [8, 128], strides = [1, 1]} : vector<64x128xf32> to vector<8x128xf32>
    %cst_12 = arith.constant dense<0.000000e+00> : vector<8x128xf32>
    %13 = tpu.matmul %10, %6, %cst_12 {dimension_numbers = #tpu.dot_dimension_numbers<[1], [0], [0], [1], [0, 0, 1, 1], [], []>} : vector<8x32xf32>, vector<32x128xf32>, vector<8x128xf32> -> vector<8x128xf32>
    %14 = arith.addf %12, %13 : vector<8x128xf32>
    %15 = arith.negf %14 : vector<8x128xf32>
    %16 = math.exp %15 : vector<8x128xf32>
    %cst_13 = arith.constant 1.000000e+00 : f32
    %17 = vector.broadcast %cst_13 : f32 to vector<8x128xf32>
    %18 = arith.addf %17, %16 : vector<8x128xf32>
    %19 = arith.divf %17, %18 : vector<8x128xf32>
    %20 = math.tanh %14 : vector<8x128xf32>
    %21 = vector.extract_strided_slice %19 {offsets = [0, 0], sizes = [8, 32], strides = [1, 1]} : vector<8x128xf32> to vector<8x32xf32>
    %22 = vector.extract_strided_slice %19 {offsets = [0, 32], sizes = [8, 32], strides = [1, 1]} : vector<8x128xf32> to vector<8x32xf32>
    %23 = vector.extract_strided_slice %20 {offsets = [0, 64], sizes = [8, 32], strides = [1, 1]} : vector<8x128xf32> to vector<8x32xf32>
    %24 = vector.extract_strided_slice %19 {offsets = [0, 96], sizes = [8, 32], strides = [1, 1]} : vector<8x128xf32> to vector<8x32xf32>
    %25 = arith.mulf %22, %11 : vector<8x32xf32>
    %26 = arith.mulf %21, %23 : vector<8x32xf32>
    %27 = arith.addf %25, %26 : vector<8x32xf32>
    %28 = math.tanh %27 : vector<8x32xf32>
    %29 = arith.mulf %24, %28 : vector<8x32xf32>
    %30 = vector.extract_strided_slice %9 {offsets = [0, 0], sizes = [8, 32], strides = [1, 1]} : vector<64x32xi1> to vector<8x32xi1>
    %31 = arith.select %30, %27, %11 : vector<8x32xi1>, vector<8x32xf32>
    %32 = arith.select %30, %29, %10 : vector<8x32xi1>, vector<8x32xf32>
    %cst_14 = arith.constant 0.000000e+00 : f32
    %33 = vector.broadcast %cst_14 : f32 to vector<8x32xf32>
    %34 = arith.select %30, %29, %33 : vector<8x32xi1>, vector<8x32xf32>
    %35 = vector.extract_strided_slice %5 {offsets = [8, 0], sizes = [8, 128], strides = [1, 1]} : vector<64x128xf32> to vector<8x128xf32>
    %cst_15 = arith.constant dense<0.000000e+00> : vector<8x128xf32>
    %36 = tpu.matmul %32, %6, %cst_15 {dimension_numbers = #tpu.dot_dimension_numbers<[1], [0], [0], [1], [0, 0, 1, 1], [], []>} : vector<8x32xf32>, vector<32x128xf32>, vector<8x128xf32> -> vector<8x128xf32>
    %37 = arith.addf %35, %36 : vector<8x128xf32>
    %38 = arith.negf %37 : vector<8x128xf32>
    %39 = math.exp %38 : vector<8x128xf32>
    %cst_16 = arith.constant 1.000000e+00 : f32
    %40 = vector.broadcast %cst_16 : f32 to vector<8x128xf32>
    %41 = arith.addf %40, %39 : vector<8x128xf32>
    %42 = arith.divf %40, %41 : vector<8x128xf32>
    %43 = math.tanh %37 : vector<8x128xf32>
    %44 = vector.extract_strided_slice %42 {offsets = [0, 0], sizes = [8, 32], strides = [1, 1]} : vector<8x128xf32> to vector<8x32xf32>
    %45 = vector.extract_strided_slice %42 {offsets = [0, 32], sizes = [8, 32], strides = [1, 1]} : vector<8x128xf32> to vector<8x32xf32>
    %46 = vector.extract_strided_slice %43 {offsets = [0, 64], sizes = [8, 32], strides = [1, 1]} : vector<8x128xf32> to vector<8x32xf32>
    %47 = vector.extract_strided_slice %42 {offsets = [0, 96], sizes = [8, 32], strides = [1, 1]} : vector<8x128xf32> to vector<8x32xf32>
    %48 = arith.mulf %45, %31 : vector<8x32xf32>
    %49 = arith.mulf %44, %46 : vector<8x32xf32>
    %50 = arith.addf %48, %49 : vector<8x32xf32>
    %51 = math.tanh %50 : vector<8x32xf32>
    %52 = arith.mulf %47, %51 : vector<8x32xf32>
    %53 = vector.extract_strided_slice %9 {offsets = [8, 0], sizes = [8, 32], strides = [1, 1]} : vector<64x32xi1> to vector<8x32xi1>
    %54 = arith.select %53, %50, %31 : vector<8x32xi1>, vector<8x32xf32>
    %55 = arith.select %53, %52, %32 : vector<8x32xi1>, vector<8x32xf32>
    %cst_17 = arith.constant 0.000000e+00 : f32
    %56 = vector.broadcast %cst_17 : f32 to vector<8x32xf32>
    %57 = arith.select %53, %52, %56 : vector<8x32xi1>, vector<8x32xf32>
    %58 = vector.extract_strided_slice %5 {offsets = [16, 0], sizes = [8, 128], strides = [1, 1]} : vector<64x128xf32> to vector<8x128xf32>
    %cst_18 = arith.constant dense<0.000000e+00> : vector<8x128xf32>
    %59 = tpu.matmul %55, %6, %cst_18 {dimension_numbers = #tpu.dot_dimension_numbers<[1], [0], [0], [1], [0, 0, 1, 1], [], []>} : vector<8x32xf32>, vector<32x128xf32>, vector<8x128xf32> -> vector<8x128xf32>
    %60 = arith.addf %58, %59 : vector<8x128xf32>
    %61 = arith.negf %60 : vector<8x128xf32>
    %62 = math.exp %61 : vector<8x128xf32>
    %cst_19 = arith.constant 1.000000e+00 : f32
    %63 = vector.broadcast %cst_19 : f32 to vector<8x128xf32>
    %64 = arith.addf %63, %62 : vector<8x128xf32>
    %65 = arith.divf %63, %64 : vector<8x128xf32>
    %66 = math.tanh %60 : vector<8x128xf32>
    %67 = vector.extract_strided_slice %65 {offsets = [0, 0], sizes = [8, 32], strides = [1, 1]} : vector<8x128xf32> to vector<8x32xf32>
    %68 = vector.extract_strided_slice %65 {offsets = [0, 32], sizes = [8, 32], strides = [1, 1]} : vector<8x128xf32> to vector<8x32xf32>
    %69 = vector.extract_strided_slice %66 {offsets = [0, 64], sizes = [8, 32], strides = [1, 1]} : vector<8x128xf32> to vector<8x32xf32>
    %70 = vector.extract_strided_slice %65 {offsets = [0, 96], sizes = [8, 32], strides = [1, 1]} : vector<8x128xf32> to vector<8x32xf32>
    %71 = arith.mulf %68, %54 : vector<8x32xf32>
    %72 = arith.mulf %67, %69 : vector<8x32xf32>
    %73 = arith.addf %71, %72 : vector<8x32xf32>
    %74 = math.tanh %73 : vector<8x32xf32>
    %75 = arith.mulf %70, %74 : vector<8x32xf32>
    %76 = vector.extract_strided_slice %9 {offsets = [16, 0], sizes = [8, 32], strides = [1, 1]} : vector<64x32xi1> to vector<8x32xi1>
    %77 = arith.select %76, %73, %54 : vector<8x32xi1>, vector<8x32xf32>
    %78 = arith.select %76, %75, %55 : vector<8x32xi1>, vector<8x32xf32>
    %cst_20 = arith.constant 0.000000e+00 : f32
    %79 = vector.broadcast %cst_20 : f32 to vector<8x32xf32>
    %80 = arith.select %76, %75, %79 : vector<8x32xi1>, vector<8x32xf32>
    %81 = vector.extract_strided_slice %5 {offsets = [24, 0], sizes = [8, 128], strides = [1, 1]} : vector<64x128xf32> to vector<8x128xf32>
    %cst_21 = arith.constant dense<0.000000e+00> : vector<8x128xf32>
    %82 = tpu.matmul %78, %6, %cst_21 {dimension_numbers = #tpu.dot_dimension_numbers<[1], [0], [0], [1], [0, 0, 1, 1], [], []>} : vector<8x32xf32>, vector<32x128xf32>, vector<8x128xf32> -> vector<8x128xf32>
    %83 = arith.addf %81, %82 : vector<8x128xf32>
    %84 = arith.negf %83 : vector<8x128xf32>
    %85 = math.exp %84 : vector<8x128xf32>
    %cst_22 = arith.constant 1.000000e+00 : f32
    %86 = vector.broadcast %cst_22 : f32 to vector<8x128xf32>
    %87 = arith.addf %86, %85 : vector<8x128xf32>
    %88 = arith.divf %86, %87 : vector<8x128xf32>
    %89 = math.tanh %83 : vector<8x128xf32>
    %90 = vector.extract_strided_slice %88 {offsets = [0, 0], sizes = [8, 32], strides = [1, 1]} : vector<8x128xf32> to vector<8x32xf32>
    %91 = vector.extract_strided_slice %88 {offsets = [0, 32], sizes = [8, 32], strides = [1, 1]} : vector<8x128xf32> to vector<8x32xf32>
    %92 = vector.extract_strided_slice %89 {offsets = [0, 64], sizes = [8, 32], strides = [1, 1]} : vector<8x128xf32> to vector<8x32xf32>
    %93 = vector.extract_strided_slice %88 {offsets = [0, 96], sizes = [8, 32], strides = [1, 1]} : vector<8x128xf32> to vector<8x32xf32>
    %94 = arith.mulf %91, %77 : vector<8x32xf32>
    %95 = arith.mulf %90, %92 : vector<8x32xf32>
    %96 = arith.addf %94, %95 : vector<8x32xf32>
    %97 = math.tanh %96 : vector<8x32xf32>
    %98 = arith.mulf %93, %97 : vector<8x32xf32>
    %99 = vector.extract_strided_slice %9 {offsets = [24, 0], sizes = [8, 32], strides = [1, 1]} : vector<64x32xi1> to vector<8x32xi1>
    %100 = arith.select %99, %96, %77 : vector<8x32xi1>, vector<8x32xf32>
    %101 = arith.select %99, %98, %78 : vector<8x32xi1>, vector<8x32xf32>
    %cst_23 = arith.constant 0.000000e+00 : f32
    %102 = vector.broadcast %cst_23 : f32 to vector<8x32xf32>
    %103 = arith.select %99, %98, %102 : vector<8x32xi1>, vector<8x32xf32>
    %104 = vector.extract_strided_slice %5 {offsets = [32, 0], sizes = [8, 128], strides = [1, 1]} : vector<64x128xf32> to vector<8x128xf32>
    %cst_24 = arith.constant dense<0.000000e+00> : vector<8x128xf32>
    %105 = tpu.matmul %101, %6, %cst_24 {dimension_numbers = #tpu.dot_dimension_numbers<[1], [0], [0], [1], [0, 0, 1, 1], [], []>} : vector<8x32xf32>, vector<32x128xf32>, vector<8x128xf32> -> vector<8x128xf32>
    %106 = arith.addf %104, %105 : vector<8x128xf32>
    %107 = arith.negf %106 : vector<8x128xf32>
    %108 = math.exp %107 : vector<8x128xf32>
    %cst_25 = arith.constant 1.000000e+00 : f32
    %109 = vector.broadcast %cst_25 : f32 to vector<8x128xf32>
    %110 = arith.addf %109, %108 : vector<8x128xf32>
    %111 = arith.divf %109, %110 : vector<8x128xf32>
    %112 = math.tanh %106 : vector<8x128xf32>
    %113 = vector.extract_strided_slice %111 {offsets = [0, 0], sizes = [8, 32], strides = [1, 1]} : vector<8x128xf32> to vector<8x32xf32>
    %114 = vector.extract_strided_slice %111 {offsets = [0, 32], sizes = [8, 32], strides = [1, 1]} : vector<8x128xf32> to vector<8x32xf32>
    %115 = vector.extract_strided_slice %112 {offsets = [0, 64], sizes = [8, 32], strides = [1, 1]} : vector<8x128xf32> to vector<8x32xf32>
    %116 = vector.extract_strided_slice %111 {offsets = [0, 96], sizes = [8, 32], strides = [1, 1]} : vector<8x128xf32> to vector<8x32xf32>
    %117 = arith.mulf %114, %100 : vector<8x32xf32>
    %118 = arith.mulf %113, %115 : vector<8x32xf32>
    %119 = arith.addf %117, %118 : vector<8x32xf32>
    %120 = math.tanh %119 : vector<8x32xf32>
    %121 = arith.mulf %116, %120 : vector<8x32xf32>
    %122 = vector.extract_strided_slice %9 {offsets = [32, 0], sizes = [8, 32], strides = [1, 1]} : vector<64x32xi1> to vector<8x32xi1>
    %123 = arith.select %122, %119, %100 : vector<8x32xi1>, vector<8x32xf32>
    %124 = arith.select %122, %121, %101 : vector<8x32xi1>, vector<8x32xf32>
    %cst_26 = arith.constant 0.000000e+00 : f32
    %125 = vector.broadcast %cst_26 : f32 to vector<8x32xf32>
    %126 = arith.select %122, %121, %125 : vector<8x32xi1>, vector<8x32xf32>
    %127 = vector.extract_strided_slice %5 {offsets = [40, 0], sizes = [8, 128], strides = [1, 1]} : vector<64x128xf32> to vector<8x128xf32>
    %cst_27 = arith.constant dense<0.000000e+00> : vector<8x128xf32>
    %128 = tpu.matmul %124, %6, %cst_27 {dimension_numbers = #tpu.dot_dimension_numbers<[1], [0], [0], [1], [0, 0, 1, 1], [], []>} : vector<8x32xf32>, vector<32x128xf32>, vector<8x128xf32> -> vector<8x128xf32>
    %129 = arith.addf %127, %128 : vector<8x128xf32>
    %130 = arith.negf %129 : vector<8x128xf32>
    %131 = math.exp %130 : vector<8x128xf32>
    %cst_28 = arith.constant 1.000000e+00 : f32
    %132 = vector.broadcast %cst_28 : f32 to vector<8x128xf32>
    %133 = arith.addf %132, %131 : vector<8x128xf32>
    %134 = arith.divf %132, %133 : vector<8x128xf32>
    %135 = math.tanh %129 : vector<8x128xf32>
    %136 = vector.extract_strided_slice %134 {offsets = [0, 0], sizes = [8, 32], strides = [1, 1]} : vector<8x128xf32> to vector<8x32xf32>
    %137 = vector.extract_strided_slice %134 {offsets = [0, 32], sizes = [8, 32], strides = [1, 1]} : vector<8x128xf32> to vector<8x32xf32>
    %138 = vector.extract_strided_slice %135 {offsets = [0, 64], sizes = [8, 32], strides = [1, 1]} : vector<8x128xf32> to vector<8x32xf32>
    %139 = vector.extract_strided_slice %134 {offsets = [0, 96], sizes = [8, 32], strides = [1, 1]} : vector<8x128xf32> to vector<8x32xf32>
    %140 = arith.mulf %137, %123 : vector<8x32xf32>
    %141 = arith.mulf %136, %138 : vector<8x32xf32>
    %142 = arith.addf %140, %141 : vector<8x32xf32>
    %143 = math.tanh %142 : vector<8x32xf32>
    %144 = arith.mulf %139, %143 : vector<8x32xf32>
    %145 = vector.extract_strided_slice %9 {offsets = [40, 0], sizes = [8, 32], strides = [1, 1]} : vector<64x32xi1> to vector<8x32xi1>
    %146 = arith.select %145, %142, %123 : vector<8x32xi1>, vector<8x32xf32>
    %147 = arith.select %145, %144, %124 : vector<8x32xi1>, vector<8x32xf32>
    %cst_29 = arith.constant 0.000000e+00 : f32
    %148 = vector.broadcast %cst_29 : f32 to vector<8x32xf32>
    %149 = arith.select %145, %144, %148 : vector<8x32xi1>, vector<8x32xf32>
    %150 = vector.extract_strided_slice %5 {offsets = [48, 0], sizes = [8, 128], strides = [1, 1]} : vector<64x128xf32> to vector<8x128xf32>
    %cst_30 = arith.constant dense<0.000000e+00> : vector<8x128xf32>
    %151 = tpu.matmul %147, %6, %cst_30 {dimension_numbers = #tpu.dot_dimension_numbers<[1], [0], [0], [1], [0, 0, 1, 1], [], []>} : vector<8x32xf32>, vector<32x128xf32>, vector<8x128xf32> -> vector<8x128xf32>
    %152 = arith.addf %150, %151 : vector<8x128xf32>
    %153 = arith.negf %152 : vector<8x128xf32>
    %154 = math.exp %153 : vector<8x128xf32>
    %cst_31 = arith.constant 1.000000e+00 : f32
    %155 = vector.broadcast %cst_31 : f32 to vector<8x128xf32>
    %156 = arith.addf %155, %154 : vector<8x128xf32>
    %157 = arith.divf %155, %156 : vector<8x128xf32>
    %158 = math.tanh %152 : vector<8x128xf32>
    %159 = vector.extract_strided_slice %157 {offsets = [0, 0], sizes = [8, 32], strides = [1, 1]} : vector<8x128xf32> to vector<8x32xf32>
    %160 = vector.extract_strided_slice %157 {offsets = [0, 32], sizes = [8, 32], strides = [1, 1]} : vector<8x128xf32> to vector<8x32xf32>
    %161 = vector.extract_strided_slice %158 {offsets = [0, 64], sizes = [8, 32], strides = [1, 1]} : vector<8x128xf32> to vector<8x32xf32>
    %162 = vector.extract_strided_slice %157 {offsets = [0, 96], sizes = [8, 32], strides = [1, 1]} : vector<8x128xf32> to vector<8x32xf32>
    %163 = arith.mulf %160, %146 : vector<8x32xf32>
    %164 = arith.mulf %159, %161 : vector<8x32xf32>
    %165 = arith.addf %163, %164 : vector<8x32xf32>
    %166 = math.tanh %165 : vector<8x32xf32>
    %167 = arith.mulf %162, %166 : vector<8x32xf32>
    %168 = vector.extract_strided_slice %9 {offsets = [48, 0], sizes = [8, 32], strides = [1, 1]} : vector<64x32xi1> to vector<8x32xi1>
    %169 = arith.select %168, %165, %146 : vector<8x32xi1>, vector<8x32xf32>
    %170 = arith.select %168, %167, %147 : vector<8x32xi1>, vector<8x32xf32>
    %cst_32 = arith.constant 0.000000e+00 : f32
    %171 = vector.broadcast %cst_32 : f32 to vector<8x32xf32>
    %172 = arith.select %168, %167, %171 : vector<8x32xi1>, vector<8x32xf32>
    %173 = vector.extract_strided_slice %5 {offsets = [56, 0], sizes = [8, 128], strides = [1, 1]} : vector<64x128xf32> to vector<8x128xf32>
    %cst_33 = arith.constant dense<0.000000e+00> : vector<8x128xf32>
    %174 = tpu.matmul %170, %6, %cst_33 {dimension_numbers = #tpu.dot_dimension_numbers<[1], [0], [0], [1], [0, 0, 1, 1], [], []>} : vector<8x32xf32>, vector<32x128xf32>, vector<8x128xf32> -> vector<8x128xf32>
    %175 = arith.addf %173, %174 : vector<8x128xf32>
    %176 = arith.negf %175 : vector<8x128xf32>
    %177 = math.exp %176 : vector<8x128xf32>
    %cst_34 = arith.constant 1.000000e+00 : f32
    %178 = vector.broadcast %cst_34 : f32 to vector<8x128xf32>
    %179 = arith.addf %178, %177 : vector<8x128xf32>
    %180 = arith.divf %178, %179 : vector<8x128xf32>
    %181 = math.tanh %175 : vector<8x128xf32>
    %182 = vector.extract_strided_slice %180 {offsets = [0, 0], sizes = [8, 32], strides = [1, 1]} : vector<8x128xf32> to vector<8x32xf32>
    %183 = vector.extract_strided_slice %180 {offsets = [0, 32], sizes = [8, 32], strides = [1, 1]} : vector<8x128xf32> to vector<8x32xf32>
    %184 = vector.extract_strided_slice %181 {offsets = [0, 64], sizes = [8, 32], strides = [1, 1]} : vector<8x128xf32> to vector<8x32xf32>
    %185 = vector.extract_strided_slice %180 {offsets = [0, 96], sizes = [8, 32], strides = [1, 1]} : vector<8x128xf32> to vector<8x32xf32>
    %186 = arith.mulf %183, %169 : vector<8x32xf32>
    %187 = arith.mulf %182, %184 : vector<8x32xf32>
    %188 = arith.addf %186, %187 : vector<8x32xf32>
    %189 = math.tanh %188 : vector<8x32xf32>
    %190 = arith.mulf %185, %189 : vector<8x32xf32>
    %191 = vector.extract_strided_slice %9 {offsets = [56, 0], sizes = [8, 32], strides = [1, 1]} : vector<64x32xi1> to vector<8x32xi1>
    %192 = arith.select %191, %188, %169 : vector<8x32xi1>, vector<8x32xf32>
    %193 = arith.select %191, %190, %170 : vector<8x32xi1>, vector<8x32xf32>
    %cst_35 = arith.constant 0.000000e+00 : f32
    %194 = vector.broadcast %cst_35 : f32 to vector<8x32xf32>
    %195 = arith.select %191, %190, %194 : vector<8x32xi1>, vector<8x32xf32>
    %196 = tpu.concatenate %34, %57, %80, %103, %126, %149, %172, %195 in 0 : vector<8x32xf32>, vector<8x32xf32>, vector<8x32xf32>, vector<8x32xf32>, vector<8x32xf32>, vector<8x32xf32>, vector<8x32xf32>, vector<8x32xf32> -> vector<64x32xf32>
    %c0_36 = arith.constant 0 : index
    %c0_37 = arith.constant 0 : index
    %197 = vector.load %arg5[%c0_36, %c0_37] : memref<64x32xf32, #tpu.memory_space<vmem>>, vector<64x32xf32>
    tpu.vector_store %arg5[%c0_36, %c0_37], %196 {strides = array<i32>} : memref<64x32xf32, #tpu.memory_space<vmem>>, vector<64x32xf32>,
    %c0_38 = arith.constant 0 : index
    %c0_39 = arith.constant 0 : index
    %198 = vector.load %arg6[%c0_38, %c0_39] : memref<8x32xf32, #tpu.memory_space<vmem>>, vector<8x32xf32>
    tpu.vector_store %arg6[%c0_38, %c0_39], %193 {strides = array<i32>} : memref<8x32xf32, #tpu.memory_space<vmem>>, vector<8x32xf32>,
    %c0_40 = arith.constant 0 : index
    %c0_41 = arith.constant 0 : index
    %199 = vector.load %arg7[%c0_40, %c0_41] : memref<8x32xf32, #tpu.memory_space<vmem>>, vector<8x32xf32>
    tpu.vector_store %arg7[%c0_40, %c0_41], %192 {strides = array<i32>} : memref<8x32xf32, #tpu.memory_space<vmem>>, vector<8x32xf32>,
    return
  }
}

</mosaic_0001>

<llo_original>
// kernel: noise_rnn_forward.1
$region0: #{noise_rnn_forward.1}
  #allocation0 [shape = 'u32[]', space=smem, size = 0x4, offset = 0x4, fixed_abs, tag = 'smem constant byte address 0x4 - core index']
  #allocation1 [shape = 'u32[144,128]{1,0:T(1,128)}', space=vmem, size = 0x12000, scoped, tag = 'internal scratch']
  %s0 = inlined_call_operand.vmem [shape: f32[64,32], index: 0, kind: input, shape index: {}]
  %s1 = inlined_call_operand.vmem [shape: f32[64,16], index: 1, kind: input, shape index: {}]
  %s2 = inlined_call_operand.vmem [shape: f32[16,128], index: 2, kind: input, shape index: {}]
  %s3 = inlined_call_operand.vmem [shape: f32[32,128], index: 3, kind: input, shape index: {}]
  %s4 = inlined_call_operand.vmem [shape: f32[1,128], index: 4, kind: input, shape index: {}]
  %s5 = inlined_call_operand.vmem [shape: f32[64,32], index: 5, kind: output, shape index: {0}]
  %s6 = inlined_call_operand.vmem [shape: f32[8,32], index: 6, kind: output, shape index: {1}]
  %s7 = inlined_call_operand.vmem [shape: f32[8,32], index: 7, kind: output, shape index: {2}]
  %8 = xla_tuple %s5, %s6, %s7
  %s9 = sld [smem:[#allocation0]]
  $region46: #{noise_rnn_forward.1} parent=0
    _
  %s11 = ssub.s32 1, %s9
  %s12 = scalar_select 0, %s11, %s9
  // Predicated region
  $region2: #{noise_rnn_forward.1} parent=0 // pred_check
    _
  $region3: #{noise_rnn_forward.1} parent=0 // pred_check_branch
    %14 = sbr.rel (0) target = $region5
  $region4: #{noise_rnn_forward.1} parent=0 // pred_region
    _
  $region5: #{noise_rnn_forward.1} parent=0 // pred_fallthru
    _
  // Predicated region
  $region6: #{noise_rnn_forward.1} parent=0 // pred_check
    _
  $region7: #{noise_rnn_forward.1} parent=0 // pred_check_branch
    %16 = sbr.rel (0) target = $region9
  $region8: #{noise_rnn_forward.1} parent=0 // pred_region
    _
  $region9: #{noise_rnn_forward.1} parent=0 // pred_fallthru
    _
  // Predicated region
  $region10: #{noise_rnn_forward.1} parent=0 // pred_check
    _
  $region11: #{noise_rnn_forward.1} parent=0 // pred_check_branch
    %18 = sbr.rel (0) target = $region13
  $region12: #{noise_rnn_forward.1} parent=0 // pred_region
    _
  $region13: #{noise_rnn_forward.1} parent=0 // pred_fallthru
    _
  // Predicated region
  $region14: #{noise_rnn_forward.1} parent=0 // pred_check
    _
  $region15: #{noise_rnn_forward.1} parent=0 // pred_check_branch
    %20 = sbr.rel (0) target = $region17
  $region16: #{noise_rnn_forward.1} parent=0 // pred_region
    _
  $region17: #{noise_rnn_forward.1} parent=0 // pred_fallthru
    _
  // Predicated region
  $region18: #{noise_rnn_forward.1} parent=0 // pred_check
    _
  $region19: #{noise_rnn_forward.1} parent=0 // pred_check_branch
    %22 = sbr.rel (0) target = $region21
  $region20: #{noise_rnn_forward.1} parent=0 // pred_region
    _
  $region21: #{noise_rnn_forward.1} parent=0 // pred_fallthru
    _
  %v23 = vld [vmem:[%s1] sm:$0xff]
  %v24 = vld [vmem:[%s1 + $0x8] sm:$0xff]
  %v25 = vld [vmem:[%s1 + $0x10] sm:$0xff]
  %v26 = vld [vmem:[%s1 + $0x18] sm:$0xff]
  %v27 = vld [vmem:[%s1 + $0x20] sm:$0xff]
  %v28 = vld [vmem:[%s1 + $0x28] sm:$0xff]
  %v29 = vld [vmem:[%s1 + $0x30] sm:$0xff]
  %v30 = vld [vmem:[%s1 + $0x38] sm:$0xff]
  %v31 = vld [vmem:[%s2] sm:$0xff]
  %v32 = vld [vmem:[%s2 + $0x8] sm:$0xff]
  %v33 = vld [vmem:[%s4] sm:$0x1]
  %v35 = vlaneseq
  %v36 = vshrl.u32 %v35, 7
  %v37 = vsub.s32 0, %v36
  %v38 = vrot.slane %v33, %v37
  %vm40 = vcmask 130048
  %v42 = vsel %vm40, %v23, 0
  %v45 = vsel %vm40, %v24, 0
  %v48 = vsel %vm40, %v25, 0
  %v51 = vsel %vm40, %v26, 0
  %v54 = vsel %vm40, %v27, 0
  %v57 = vsel %vm40, %v28, 0
  %v60 = vsel %vm40, %v29, 0
  %v63 = vsel %vm40, %v30, 0
  %65 = vmatprep.subr.mxu0 0.0
  %66 = vmatpush1.msra.mxu0 %v31
  %67 = vmatprep.subr.mxu0 0.0
  %68 = vmatpush1.msra.mxu0 %v32
  %69 = vmatprep.subr.mxu0 0.0
  %70 = vmatpush1.msra.mxu0 0.0
  %71 = vmatprep.subr.mxu0 0.0
  %72 = vmatpush1.msra.mxu0 0.0
  %73 = vmatprep.subr.mxu0 0.0
  %74 = vmatpush1.msra.mxu0 0.0
  %75 = vmatprep.subr.mxu0 0.0
  %76 = vmatpush1.msra.mxu0 0.0
  %77 = vmatprep.subr.mxu0 0.0
  %78 = vmatpush1.msra.mxu0 0.0
  %79 = vmatprep.subr.mxu0 0.0
  %80 = vmatpush1.msra.mxu0 0.0
  %81 = vmatprep.subr.mxu0 0.0
  %82 = vmatpush1.msra.mxu0 0.0
  %83 = vmatprep.subr.mxu0 0.0
  %84 = vmatpush1.msra.mxu0 0.0
  %85 = vmatprep.subr.mxu0 0.0
  %86 = vmatpush1.msra.mxu0 0.0
  %87 = vmatprep.subr.mxu0 0.0
  %88 = vmatpush1.msra.mxu0 0.0
  %89 = vmatprep.subr.mxu0 0.0
  %90 = vmatpush1.msra.mxu0 0.0
  %91 = vmatprep.subr.mxu0 0.0
  %92 = vmatpush1.msra.mxu0 0.0
  %93 = vmatprep.subr.mxu0 0.0
  %94 = vmatpush1.msra.mxu0 0.0
  %95 = vmatprep.subr.mxu0 0.0
  %96 = vmatpush1.msra.mxu0 0.0
  %97 = vmatprep.subr.mxu0 0.0
  %98 = vmatpush1.msra.mxu0 0.0
  %99 = vmatprep.subr.mxu0 0.0
  %100 = vmatpush1.msra.mxu0 0.0
  %101 = vmatprep.subr.mxu0 0.0
  %102 = vmatpush1.msra.mxu0 0.0
  %103 = vmatprep.subr.mxu0 0.0
  %104 = vmatpush1.msra.mxu0 0.0
  %105 = vmatprep.subr.mxu0 0.0
  %106 = vmatpush1.msra.mxu0 0.0
  %107 = vmatprep.subr.mxu0 0.0
  %108 = vmatpush1.msra.mxu0 0.0
  %109 = vmatprep.subr.mxu0 0.0
  %110 = vmatpush1.msra.mxu0 0.0
  %111 = vmatprep.subr.mxu0 0.0
  %112 = vmatpush1.msra.mxu0 0.0
  %113 = vmatprep.subr.mxu0 0.0
  %114 = vmatpush1.msra.mxu0 0.0
  %115 = vmatprep.subr.mxu0 0.0
  %116 = vmatpush1.msra.mxu0 0.0
  %117 = vmatprep.subr.mxu0 0.0
  %118 = vmatpush1.msra.mxu0 0.0
  %119 = vmatprep.subr.mxu0 0.0
  %120 = vmatpush1.msra.mxu0 0.0
  %121 = vmatprep.subr.mxu0 0.0
  %122 = vmatpush1.msra.mxu0 0.0
  %123 = vmatprep.subr.mxu0 0.0
  %124 = vmatpush1.msra.mxu0 0.0
  %125 = vmatprep.subr.mxu0 0.0
  %126 = vmatpush1.msra.mxu0 0.0
  %127 = vmatprep.subr.mxu0 0.0
  %128 = vmatpush1.msra.mxu0 0.0
  %129 = vmatprep.mubr.f32.mxu0 0.0
  %130 = vmatmul.mubr.f32.gmra.mrb[0].mxu0 %v42
  %v131 = vpop.f32.mrb[0].mxu0
  %v132 = vadd.f32 %v38, %v131
  %v133 = vpop.f32.mrb[0].mxu0
  %134 = vmatprep.mubr.f32.mxu0 0.0
  %135 = vmatmul.mubr.f32.gmra.mrb[0].mxu0 %v45
  %v136 = vpop.f32.mrb[0].mxu0
  %v137 = vadd.f32 %v38, %v136
  %v138 = vpop.f32.mrb[0].mxu0
  %139 = vmatprep.mubr.f32.mxu0 0.0
  %140 = vmatmul.mubr.f32.gmra.mrb[0].mxu0 %v48
  %v141 = vpop.f32.mrb[0].mxu0
  %v142 = vadd.f32 %v38, %v141
  %v143 = vpop.f32.mrb[0].mxu0
  %144 = vmatprep.mubr.f32.mxu0 0.0
  %145 = vmatmul.mubr.f32.gmra.mrb[0].mxu0 %v51
  %v146 = vpop.f32.mrb[0].mxu0
  %v147 = vadd.f32 %v38, %v146
  %v148 = vpop.f32.mrb[0].mxu0
  %149 = vmatprep.mubr.f32.mxu0 0.0
  %150 = vmatmul.mubr.f32.gmra.mrb[0].mxu0 %v54
  %v151 = vpop.f32.mrb[0].mxu0
  %v152 = vadd.f32 %v38, %v151
  %v153 = vpop.f32.mrb[0].mxu0
  %154 = vmatprep.mubr.f32.mxu0 0.0
  %155 = vmatmul.mubr.f32.gmra.mrb[0].mxu0 %v57
  %v156 = vpop.f32.mrb[0].mxu0
  %v157 = vadd.f32 %v38, %v156
  %v158 = vpop.f32.mrb[0].mxu0
  %159 = vmatprep.mubr.f32.mxu0 0.0
  %160 = vmatmul.mubr.f32.gmra.mrb[0].mxu0 %v60
  %v161 = vpop.f32.mrb[0].mxu0
  %v162 = vadd.f32 %v38, %v161
  %v163 = vpop.f32.mrb[0].mxu0
  %164 = vmatprep.mubr.f32.mxu0 0.0
  %165 = vmatmul.mubr.f32.gmra.mrb[0].mxu0 %v63
  %v166 = vpop.f32.mrb[0].mxu0
  %v167 = vadd.f32 %v38, %v166
  %v168 = vpop.f32.mrb[0].mxu0
  %169 = vdwg.mxu0
  %v170 = vld [vmem:[%s3] sm:$0xff]
  %v171 = vld [vmem:[%s3 + $0x8] sm:$0xff]
  %v172 = vld [vmem:[%s3 + $0x10] sm:$0xff]
  %v173 = vld [vmem:[%s3 + $0x18] sm:$0xff]
  %v174 = vld [vmem:[%s0] sm:$0xff]
  %v175 = vld [vmem:[%s0 + $0x8] sm:$0xff]
  %v176 = vld [vmem:[%s0 + $0x10] sm:$0xff]
  %v177 = vld [vmem:[%s0 + $0x18] sm:$0xff]
  %v178 = vld [vmem:[%s0 + $0x20] sm:$0xff]
  %v179 = vld [vmem:[%s0 + $0x28] sm:$0xff]
  %v180 = vld [vmem:[%s0 + $0x30] sm:$0xff]
  %v181 = vld [vmem:[%s0 + $0x38] sm:$0xff]
  %vm182 = vcmp.ne.f32.partialorder %v174, 0.0
  %vm183 = vcmp.ne.f32.partialorder %v175, 0.0
  %vm184 = vcmp.ne.f32.partialorder %v176, 0.0
  %vm185 = vcmp.ne.f32.partialorder %v177, 0.0
  %vm186 = vcmp.ne.f32.partialorder %v178, 0.0
  %vm187 = vcmp.ne.f32.partialorder %v179, 0.0
  %vm188 = vcmp.ne.f32.partialorder %v180, 0.0
  %vm189 = vcmp.ne.f32.partialorder %v181, 0.0
  %vm190 = vcmask 261120
  %v192 = vsel %vm190, 0.0, 0
  %194 = vmatprep.subr.mxu0 0.0
  %195 = vmatpush1.msra.mxu0 %v170
  %196 = vmatprep.subr.mxu0 0.0
  %197 = vmatpush1.msra.mxu0 %v171
  %198 = vmatprep.subr.mxu0 0.0
  %199 = vmatpush1.msra.mxu0 %v172
  %200 = vmatprep.subr.mxu0 0.0
  %201 = vmatpush1.msra.mxu0 %v173
  %202 = vmatprep.subr.mxu0 0.0
  %203 = vmatpush1.msra.mxu0 0.0
  %204 = vmatprep.subr.mxu0 0.0
  %205 = vmatpush1.msra.mxu0 0.0
  %206 = vmatprep.subr.mxu0 0.0
  %207 = vmatpush1.msra.mxu0 0.0
  %208 = vmatprep.subr.mxu0 0.0
  %209 = vmatpush1.msra.mxu0 0.0
  %210 = vmatprep.subr.mxu0 0.0
  %211 = vmatpush1.msra.mxu0 0.0
  %212 = vmatprep.subr.mxu0 0.0
  %213 = vmatpush1.msra.mxu0 0.0
  %214 = vmatprep.subr.mxu0 0.0
  %215 = vmatpush1.msra.mxu0 0.0
  %216 = vmatprep.subr.mxu0 0.0
  %217 = vmatpush1.msra.mxu0 0.0
  %218 = vmatprep.subr.mxu0 0.0
  %219 = vmatpush1.msra.mxu0 0.0
  %220 = vmatprep.subr.mxu0 0.0
  %221 = vmatpush1.msra.mxu0 0.0
  %222 = vmatprep.subr.mxu0 0.0
  %223 = vmatpush1.msra.mxu0 0.0
  %224 = vmatprep.subr.mxu0 0.0
  %225 = vmatpush1.msra.mxu0 0.0
  %226 = vmatprep.subr.mxu0 0.0
  %227 = vmatpush1.msra.mxu0 0.0
  %228 = vmatprep.subr.mxu0 0.0
  %229 = vmatpush1.msra.mxu0 0.0
  %230 = vmatprep.subr.mxu0 0.0
  %231 = vmatpush1.msra.mxu0 0.0
  %232 = vmatprep.subr.mxu0 0.0
  %233 = vmatpush1.msra.mxu0 0.0
  %234 = vmatprep.subr.mxu0 0.0
  %235 = vmatpush1.msra.mxu0 0.0
  %236 = vmatprep.subr.mxu0 0.0
  %237 = vmatpush1.msra.mxu0 0.0
  %238 = vmatprep.subr.mxu0 0.0
  %239 = vmatpush1.msra.mxu0 0.0
  %240 = vmatprep.subr.mxu0 0.0
  %241 = vmatpush1.msra.mxu0 0.0
  %242 = vmatprep.subr.mxu0 0.0
  %243 = vmatpush1.msra.mxu0 0.0
  %244 = vmatprep.subr.mxu0 0.0
  %245 = vmatpush1.msra.mxu0 0.0
  %246 = vmatprep.subr.mxu0 0.0
  %247 = vmatpush1.msra.mxu0 0.0
  %248 = vmatprep.subr.mxu0 0.0
  %249 = vmatpush1.msra.mxu0 0.0
  %250 = vmatprep.subr.mxu0 0.0
  %251 = vmatpush1.msra.mxu0 0.0
  %252 = vmatprep.subr.mxu0 0.0
  %253 = vmatpush1.msra.mxu0 0.0
  %254 = vmatprep.subr.mxu0 0.0
  %255 = vmatpush1.msra.mxu0 0.0
  %256 = vmatprep.subr.mxu0 0.0
  %257 = vmatpush1.msra.mxu0 0.0
  %258 = vmatprep.mubr.f32.mxu0 0.0
  %259 = vmatmul.mubr.f32.gmra.mrb[0].mxu0 %v192
  %v260 = vpop.f32.mrb[0].mxu0
  %v261 = vadd.f32 0.0, %v260
  %v262 = vpop.f32.mrb[0].mxu0
  %263 = vdwg.mxu0
  %v264 = vadd.f32 %v132, %v261
  %v265 = vxor.u32 %v264, 2147483648
  %v266 = vmul.f32 %v265, 1.442695
  %v267 = vpow.pop %v266
  %v268 = vadd.f32 %v267, 1.0
  %v269 = vrcp.pop %v268
  %v270 = vmul.f32 1.0, %v269
  %v271 = vtanh.pop %v264
  %v272 = vmul.f32 %v270, 0.0
  %274 = vrot.lane.b32.xlu0 %v271, 64
  %v275 = vpop.permute.xlu0 %274
  %v277 = vmul.f32 %v270, %v275
  %279 = vrot.lane.b32.xlu0 %v277, 32
  %v280 = vpop.permute.xlu0 %279
  %v282 = vadd.f32 %v272, %v280
  %v283 = vtanh.pop %v282
  %285 = vrot.lane.b32.xlu0 %v283, 64
  %v286 = vpop.permute.xlu0 %285
  %v288 = vmul.f32 %v270, %v286
  %290 = vrot.lane.b32.xlu0 %v282, 96
  %v291 = vpop.permute.xlu0 %290
  %v293 = vsel %vm182, %v291, 0.0
  %295 = vrot.lane.b32.xlu0 %v288, 32
  %v296 = vpop.permute.xlu0 %295
  %v298 = vsel %vm182, %v296, 0.0
  %v300 = vsel %vm190, %v298, 0
  %302 = vmatprep.subr.mxu0 0.0
  %303 = vmatpush1.msra.mxu0 %v170
  %304 = vmatprep.subr.mxu0 0.0
  %305 = vmatpush1.msra.mxu0 %v171
  %306 = vmatprep.subr.mxu0 0.0
  %307 = vmatpush1.msra.mxu0 %v172
  %308 = vmatprep.subr.mxu0 0.0
  %309 = vmatpush1.msra.mxu0 %v173
  %310 = vmatprep.subr.mxu0 0.0
  %311 = vmatpush1.msra.mxu0 0.0
  %312 = vmatprep.subr.mxu0 0.0
  %313 = vmatpush1.msra.mxu0 0.0
  %314 = vmatprep.subr.mxu0 0.0
  %315 = vmatpush1.msra.mxu0 0.0
  %316 = vmatprep.subr.mxu0 0.0
  %317 = vmatpush1.msra.mxu0 0.0
  %318 = vmatprep.subr.mxu0 0.0
  %319 = vmatpush1.msra.mxu0 0.0
  %320 = vmatprep.subr.mxu0 0.0
  %321 = vmatpush1.msra.mxu0 0.0
  %322 = vmatprep.subr.mxu0 0.0
  %323 = vmatpush1.msra.mxu0 0.0
  %324 = vmatprep.subr.mxu0 0.0
  %325 = vmatpush1.msra.mxu0 0.0
  %326 = vmatprep.subr.mxu0 0.0
  %327 = vmatpush1.msra.mxu0 0.0
  %328 = vmatprep.subr.mxu0 0.0
  %329 = vmatpush1.msra.mxu0 0.0
  %330 = vmatprep.subr.mxu0 0.0
  %331 = vmatpush1.msra.mxu0 0.0
  %332 = vmatprep.subr.mxu0 0.0
  %333 = vmatpush1.msra.mxu0 0.0
  %334 = vmatprep.subr.mxu0 0.0
  %335 = vmatpush1.msra.mxu0 0.0
  %336 = vmatprep.subr.mxu0 0.0
  %337 = vmatpush1.msra.mxu0 0.0
  %338 = vmatprep.subr.mxu0 0.0
  %339 = vmatpush1.msra.mxu0 0.0
  %340 = vmatprep.subr.mxu0 0.0
  %341 = vmatpush1.msra.mxu0 0.0
  %342 = vmatprep.subr.mxu0 0.0
  %343 = vmatpush1.msra.mxu0 0.0
  %344 = vmatprep.subr.mxu0 0.0
  %345 = vmatpush1.msra.mxu0 0.0
  %346 = vmatprep.subr.mxu0 0.0
  %347 = vmatpush1.msra.mxu0 0.0
  %348 = vmatprep.subr.mxu0 0.0
  %349 = vmatpush1.msra.mxu0 0.0
  %350 = vmatprep.subr.mxu0 0.0
  %351 = vmatpush1.msra.mxu0 0.0
  %352 = vmatprep.subr.mxu0 0.0
  %353 = vmatpush1.msra.mxu0 0.0
  %354 = vmatprep.subr.mxu0 0.0
  %355 = vmatpush1.msra.mxu0 0.0
  %356 = vmatprep.subr.mxu0 0.0
  %357 = vmatpush1.msra.mxu0 0.0
  %358 = vmatprep.subr.mxu0 0.0
  %359 = vmatpush1.msra.mxu0 0.0
  %360 = vmatprep.subr.mxu0 0.0
  %361 = vmatpush1.msra.mxu0 0.0
  %362 = vmatprep.subr.mxu0 0.0
  %363 = vmatpush1.msra.mxu0 0.0
  %364 = vmatprep.subr.mxu0 0.0
  %365 = vmatpush1.msra.mxu0 0.0
  %366 = vmatprep.mubr.f32.mxu0 0.0
  %367 = vmatmul.mubr.f32.gmra.mrb[0].mxu0 %v300
  %v368 = vpop.f32.mrb[0].mxu0
  %v369 = vadd.f32 0.0, %v368
  %v370 = vpop.f32.mrb[0].mxu0
  %371 = vdwg.mxu0
  %v372 = vadd.f32 %v137, %v369
  %v373 = vxor.u32 %v372, 2147483648
  %v374 = vmul.f32 %v373, 1.442695
  %v375 = vpow.pop %v374
  %v376 = vadd.f32 %v375, 1.0
  %v377 = vrcp.pop %v376
  %v378 = vmul.f32 1.0, %v377
  %v379 = vtanh.pop %v372
  %381 = vrot.lane.b32.xlu0 %v293, 32
  %v382 = vpop.permute.xlu0 %381
  %v384 = vmul.f32 %v378, %v382
  %386 = vrot.lane.b32.xlu0 %v379, 64
  %v387 = vpop.permute.xlu0 %386
  %v389 = vmul.f32 %v378, %v387
  %391 = vrot.lane.b32.xlu0 %v389, 32
  %v392 = vpop.permute.xlu0 %391
  %v394 = vadd.f32 %v384, %v392
  %v395 = vtanh.pop %v394
  %397 = vrot.lane.b32.xlu0 %v395, 64
  %v398 = vpop.permute.xlu0 %397
  %v400 = vmul.f32 %v378, %v398
  %402 = vrot.lane.b32.xlu0 %v394, 96
  %v403 = vpop.permute.xlu0 %402
  %v405 = vsel %vm183, %v403, %v293
  %407 = vrot.lane.b32.xlu0 %v400, 32
  %v408 = vpop.permute.xlu0 %407
  %v410 = vsel %vm183, %v408, %v298
  %v411 = vsel %vm183, %v408, 0.0
  %v413 = vsel %vm190, %v410, 0
  %415 = vmatprep.subr.mxu0 0.0
  %416 = vmatpush1.msra.mxu0 %v170
  %417 = vmatprep.subr.mxu0 0.0
  %418 = vmatpush1.msra.mxu0 %v171
  %419 = vmatprep.subr.mxu0 0.0
  %420 = vmatpush1.msra.mxu0 %v172
  %421 = vmatprep.subr.mxu0 0.0
  %422 = vmatpush1.msra.mxu0 %v173
  %423 = vmatprep.subr.mxu0 0.0
  %424 = vmatpush1.msra.mxu0 0.0
  %425 = vmatprep.subr.mxu0 0.0
  %426 = vmatpush1.msra.mxu0 0.0
  %427 = vmatprep.subr.mxu0 0.0
  %428 = vmatpush1.msra.mxu0 0.0
  %429 = vmatprep.subr.mxu0 0.0
  %430 = vmatpush1.msra.mxu0 0.0
  %431 = vmatprep.subr.mxu0 0.0
  %432 = vmatpush1.msra.mxu0 0.0
  %433 = vmatprep.subr.mxu0 0.0
  %434 = vmatpush1.msra.mxu0 0.0
  %435 = vmatprep.subr.mxu0 0.0
  %436 = vmatpush1.msra.mxu0 0.0
  %437 = vmatprep.subr.mxu0 0.0
  %438 = vmatpush1.msra.mxu0 0.0
  %439 = vmatprep.subr.mxu0 0.0
  %440 = vmatpush1.msra.mxu0 0.0
  %441 = vmatprep.subr.mxu0 0.0
  %442 = vmatpush1.msra.mxu0 0.0
  %443 = vmatprep.subr.mxu0 0.0
  %444 = vmatpush1.msra.mxu0 0.0
  %445 = vmatprep.subr.mxu0 0.0
  %446 = vmatpush1.msra.mxu0 0.0
  %447 = vmatprep.subr.mxu0 0.0
  %448 = vmatpush1.msra.mxu0 0.0
  %449 = vmatprep.subr.mxu0 0.0
  %450 = vmatpush1.msra.mxu0 0.0
  %451 = vmatprep.subr.mxu0 0.0
  %452 = vmatpush1.msra.mxu0 0.0
  %453 = vmatprep.subr.mxu0 0.0
  %454 = vmatpush1.msra.mxu0 0.0
  %455 = vmatprep.subr.mxu0 0.0
  %456 = vmatpush1.msra.mxu0 0.0
  %457 = vmatprep.subr.mxu0 0.0
  %458 = vmatpush1.msra.mxu0 0.0
  %459 = vmatprep.subr.mxu0 0.0
  %460 = vmatpush1.msra.mxu0 0.0
  %461 = vmatprep.subr.mxu0 0.0
  %462 = vmatpush1.msra.mxu0 0.0
  %463 = vmatprep.subr.mxu0 0.0
  %464 = vmatpush1.msra.mxu0 0.0
  %465 = vmatprep.subr.mxu0 0.0
  %466 = vmatpush1.msra.mxu0 0.0
  %467 = vmatprep.subr.mxu0 0.0
  %468 = vmatpush1.msra.mxu0 0.0
  %469 = vmatprep.subr.mxu0 0.0
  %470 = vmatpush1.msra.mxu0 0.0
  %471 = vmatprep.subr.mxu0 0.0
  %472 = vmatpush1.msra.mxu0 0.0
  %473 = vmatprep.subr.mxu0 0.0
  %474 = vmatpush1.msra.mxu0 0.0
  %475 = vmatprep.subr.mxu0 0.0
  %476 = vmatpush1.msra.mxu0 0.0
  %477 = vmatprep.subr.mxu0 0.0
  %478 = vmatpush1.msra.mxu0 0.0
  %479 = vmatprep.mubr.f32.mxu0 0.0
  %480 = vmatmul.mubr.f32.gmra.mrb[0].mxu0 %v413
  %v481 = vpop.f32.mrb[0].mxu0
  %v482 = vadd.f32 0.0, %v481
  %v483 = vpop.f32.mrb[0].mxu0
  %484 = vdwg.mxu0
  %v485 = vadd.f32 %v142, %v482
  %v486 = vxor.u32 %v485, 2147483648
  %v487 = vmul.f32 %v486, 1.442695
  %v488 = vpow.pop %v487
  %v489 = vadd.f32 %v488, 1.0
  %v490 = vrcp.pop %v489
  %v491 = vmul.f32 1.0, %v490
  %v492 = vtanh.pop %v485
  %494 = vrot.lane.b32.xlu0 %v405, 32
  %v495 = vpop.permute.xlu0 %494
  %v497 = vmul.f32 %v491, %v495
  %499 = vrot.lane.b32.xlu0 %v492, 64
  %v500 = vpop.permute.xlu0 %499
  %v502 = vmul.f32 %v491, %v500
  %504 = vrot.lane.b32.xlu0 %v502, 32
  %v505 = vpop.permute.xlu0 %504
  %v507 = vadd.f32 %v497, %v505
  %v508 = vtanh.pop %v507
  %510 = vrot.lane.b32.xlu0 %v508, 64
  %v511 = vpop.permute.xlu0 %510
  %v513 = vmul.f32 %v491, %v511
  %515 = vrot.lane.b32.xlu0 %v507, 96
  %v516 = vpop.permute.xlu0 %515
  %v518 = vsel %vm184, %v516, %v405
  %520 = vrot.lane.b32.xlu0 %v513, 32
  %v521 = vpop.permute.xlu0 %520
  %v523 = vsel %vm184, %v521, %v410
  %v524 = vsel %vm184, %v521, 0.0
  %v526 = vsel %vm190, %v523, 0
  %528 = vmatprep.subr.mxu0 0.0
  %529 = vmatpush1.msra.mxu0 %v170
  %530 = vmatprep.subr.mxu0 0.0
  %531 = vmatpush1.msra.mxu0 %v171
  %532 = vmatprep.subr.mxu0 0.0
  %533 = vmatpush1.msra.mxu0 %v172
  %534 = vmatprep.subr.mxu0 0.0
  %535 = vmatpush1.msra.mxu0 %v173
  %536 = vmatprep.subr.mxu0 0.0
  %537 = vmatpush1.msra.mxu0 0.0
  %538 = vmatprep.subr.mxu0 0.0
  %539 = vmatpush1.msra.mxu0 0.0
  %540 = vmatprep.subr.mxu0 0.0
  %541 = vmatpush1.msra.mxu0 0.0
  %542 = vmatprep.subr.mxu0 0.0
  %543 = vmatpush1.msra.mxu0 0.0
  %544 = vmatprep.subr.mxu0 0.0
  %545 = vmatpush1.msra.mxu0 0.0
  %546 = vmatprep.subr.mxu0 0.0
  %547 = vmatpush1.msra.mxu0 0.0
  %548 = vmatprep.subr.mxu0 0.0
  %549 = vmatpush1.msra.mxu0 0.0
  %550 = vmatprep.subr.mxu0 0.0
  %551 = vmatpush1.msra.mxu0 0.0
  %552 = vmatprep.subr.mxu0 0.0
  %553 = vmatpush1.msra.mxu0 0.0
  %554 = vmatprep.subr.mxu0 0.0
  %555 = vmatpush1.msra.mxu0 0.0
  %556 = vmatprep.subr.mxu0 0.0
  %557 = vmatpush1.msra.mxu0 0.0
  %558 = vmatprep.subr.mxu0 0.0
  %559 = vmatpush1.msra.mxu0 0.0
  %560 = vmatprep.subr.mxu0 0.0
  %561 = vmatpush1.msra.mxu0 0.0
  %562 = vmatprep.subr.mxu0 0.0
  %563 = vmatpush1.msra.mxu0 0.0
  %564 = vmatprep.subr.mxu0 0.0
  %565 = vmatpush1.msra.mxu0 0.0
  %566 = vmatprep.subr.mxu0 0.0
  %567 = vmatpush1.msra.mxu0 0.0
  %568 = vmatprep.subr.mxu0 0.0
  %569 = vmatpush1.msra.mxu0 0.0
  %570 = vmatprep.subr.mxu0 0.0
  %571 = vmatpush1.msra.mxu0 0.0
  %572 = vmatprep.subr.mxu0 0.0
  %573 = vmatpush1.msra.mxu0 0.0
  %574 = vmatprep.subr.mxu0 0.0
  %575 = vmatpush1.msra.mxu0 0.0
  %576 = vmatprep.subr.mxu0 0.0
  %577 = vmatpush1.msra.mxu0 0.0
  %578 = vmatprep.subr.mxu0 0.0
  %579 = vmatpush1.msra.mxu0 0.0
  %580 = vmatprep.subr.mxu0 0.0
  %581 = vmatpush1.msra.mxu0 0.0
  %582 = vmatprep.subr.mxu0 0.0
  %583 = vmatpush1.msra.mxu0 0.0
  %584 = vmatprep.subr.mxu0 0.0
  %585 = vmatpush1.msra.mxu0 0.0
  %586 = vmatprep.subr.mxu0 0.0
  %587 = vmatpush1.msra.mxu0 0.0
  %588 = vmatprep.subr.mxu0 0.0
  %589 = vmatpush1.msra.mxu0 0.0
  %590 = vmatprep.subr.mxu0 0.0
  %591 = vmatpush1.msra.mxu0 0.0
  %592 = vmatprep.mubr.f32.mxu0 0.0
  %593 = vmatmul.mubr.f32.gmra.mrb[0].mxu0 %v526
  %v594 = vpop.f32.mrb[0].mxu0
  %v595 = vadd.f32 0.0, %v594
  %v596 = vpop.f32.mrb[0].mxu0
  %597 = vdwg.mxu0
  %v598 = vadd.f32 %v147, %v595
  %v599 = vxor.u32 %v598, 2147483648
  %v600 = vmul.f32 %v599, 1.442695
  %v601 = vpow.pop %v600
  %v602 = vadd.f32 %v601, 1.0
  %v603 = vrcp.pop %v602
  %v604 = vmul.f32 1.0, %v603
  %v605 = vtanh.pop %v598
  %607 = vrot.lane.b32.xlu0 %v518, 32
  %v608 = vpop.permute.xlu0 %607
  %v610 = vmul.f32 %v604, %v608
  %612 = vrot.lane.b32.xlu0 %v605, 64
  %v613 = vpop.permute.xlu0 %612
  %v615 = vmul.f32 %v604, %v613
  %617 = vrot.lane.b32.xlu0 %v615, 32
  %v618 = vpop.permute.xlu0 %617
  %v620 = vadd.f32 %v610, %v618
  %v621 = vtanh.pop %v620
  %623 = vrot.lane.b32.xlu0 %v621, 64
  %v624 = vpop.permute.xlu0 %623
  %v626 = vmul.f32 %v604, %v624
  %628 = vrot.lane.b32.xlu0 %v620, 96
  %v629 = vpop.permute.xlu0 %628
  %v631 = vsel %vm185, %v629, %v518
  %633 = vrot.lane.b32.xlu0 %v626, 32
  %v634 = vpop.permute.xlu0 %633
  %v636 = vsel %vm185, %v634, %v523
  %v637 = vsel %vm185, %v634, 0.0
  %v639 = vsel %vm190, %v636, 0
  %641 = vmatprep.subr.mxu0 0.0
  %642 = vmatpush1.msra.mxu0 %v170
  %643 = vmatprep.subr.mxu0 0.0
  %644 = vmatpush1.msra.mxu0 %v171
  %645 = vmatprep.subr.mxu0 0.0
  %646 = vmatpush1.msra.mxu0 %v172
  %647 = vmatprep.subr.mxu0 0.0
  %648 = vmatpush1.msra.mxu0 %v173
  %649 = vmatprep.subr.mxu0 0.0
  %650 = vmatpush1.msra.mxu0 0.0
  %651 = vmatprep.subr.mxu0 0.0
  %652 = vmatpush1.msra.mxu0 0.0
  %653 = vmatprep.subr.mxu0 0.0
  %654 = vmatpush1.msra.mxu0 0.0
  %655 = vmatprep.subr.mxu0 0.0
  %656 = vmatpush1.msra.mxu0 0.0
  %657 = vmatprep.subr.mxu0 0.0
  %658 = vmatpush1.msra.mxu0 0.0
  %659 = vmatprep.subr.mxu0 0.0
  %660 = vmatpush1.msra.mxu0 0.0
  %661 = vmatprep.subr.mxu0 0.0
  %662 = vmatpush1.msra.mxu0 0.0
  %663 = vmatprep.subr.mxu0 0.0
  %664 = vmatpush1.msra.mxu0 0.0
  %665 = vmatprep.subr.mxu0 0.0
  %666 = vmatpush1.msra.mxu0 0.0
  %667 = vmatprep.subr.mxu0 0.0
  %668 = vmatpush1.msra.mxu0 0.0
  %669 = vmatprep.subr.mxu0 0.0
  %670 = vmatpush1.msra.mxu0 0.0
  %671 = vmatprep.subr.mxu0 0.0
  %672 = vmatpush1.msra.mxu0 0.0
  %673 = vmatprep.subr.mxu0 0.0
  %674 = vmatpush1.msra.mxu0 0.0
  %675 = vmatprep.subr.mxu0 0.0
  %676 = vmatpush1.msra.mxu0 0.0
  %677 = vmatprep.subr.mxu0 0.0
  %678 = vmatpush1.msra.mxu0 0.0
  %679 = vmatprep.subr.mxu0 0.0
  %680 = vmatpush1.msra.mxu0 0.0
  %681 = vmatprep.subr.mxu0 0.0
  %682 = vmatpush1.msra.mxu0 0.0
  %683 = vmatprep.subr.mxu0 0.0
  %684 = vmatpush1.msra.mxu0 0.0
  %685 = vmatprep.subr.mxu0 0.0
  %686 = vmatpush1.msra.mxu0 0.0
  %687 = vmatprep.subr.mxu0 0.0
  %688 = vmatpush1.msra.mxu0 0.0
  %689 = vmatprep.subr.mxu0 0.0
  %690 = vmatpush1.msra.mxu0 0.0
  %691 = vmatprep.subr.mxu0 0.0
  %692 = vmatpush1.msra.mxu0 0.0
  %693 = vmatprep.subr.mxu0 0.0
  %694 = vmatpush1.msra.mxu0 0.0
  %695 = vmatprep.subr.mxu0 0.0
  %696 = vmatpush1.msra.mxu0 0.0
  %697 = vmatprep.subr.mxu0 0.0
  %698 = vmatpush1.msra.mxu0 0.0
  %699 = vmatprep.subr.mxu0 0.0
  %700 = vmatpush1.msra.mxu0 0.0
  %701 = vmatprep.subr.mxu0 0.0
  %702 = vmatpush1.msra.mxu0 0.0
  %703 = vmatprep.subr.mxu0 0.0
  %704 = vmatpush1.msra.mxu0 0.0
  %705 = vmatprep.mubr.f32.mxu0 0.0
  %706 = vmatmul.mubr.f32.gmra.mrb[0].mxu0 %v639
  %v707 = vpop.f32.mrb[0].mxu0
  %v708 = vadd.f32 0.0, %v707
  %v709 = vpop.f32.mrb[0].mxu0
  %710 = vdwg.mxu0
  %v711 = vadd.f32 %v152, %v708
  %v712 = vxor.u32 %v711, 2147483648
  %v713 = vmul.f32 %v712, 1.442695
  %v714 = vpow.pop %v713
  %v715 = vadd.f32 %v714, 1.0
  %v716 = vrcp.pop %v715
  %v717 = vmul.f32 1.0, %v716
  %v718 = vtanh.pop %v711
  %720 = vrot.lane.b32.xlu0 %v631, 32
  %v721 = vpop.permute.xlu0 %720
  %v723 = vmul.f32 %v717, %v721
  %725 = vrot.lane.b32.xlu0 %v718, 64
  %v726 = vpop.permute.xlu0 %725
  %v728 = vmul.f32 %v717, %v726
  %730 = vrot.lane.b32.xlu0 %v728, 32
  %v731 = vpop.permute.xlu0 %730
  %v733 = vadd.f32 %v723, %v731
  %v734 = vtanh.pop %v733
  %736 = vrot.lane.b32.xlu0 %v734, 64
  %v737 = vpop.permute.xlu0 %736
  %v739 = vmul.f32 %v717, %v737
  %741 = vrot.lane.b32.xlu0 %v733, 96
  %v742 = vpop.permute.xlu0 %741
  %v744 = vsel %vm186, %v742, %v631
  %746 = vrot.lane.b32.xlu0 %v739, 32
  %v747 = vpop.permute.xlu0 %746
  %v749 = vsel %vm186, %v747, %v636
  %v750 = vsel %vm186, %v747, 0.0
  %v752 = vsel %vm190, %v749, 0
  %754 = vmatprep.subr.mxu0 0.0
  %755 = vmatpush1.msra.mxu0 %v170
  %756 = vmatprep.subr.mxu0 0.0
  %757 = vmatpush1.msra.mxu0 %v171
  %758 = vmatprep.subr.mxu0 0.0
  %759 = vmatpush1.msra.mxu0 %v172
  %760 = vmatprep.subr.mxu0 0.0
  %761 = vmatpush1.msra.mxu0 %v173
  %762 = vmatprep.subr.mxu0 0.0
  %763 = vmatpush1.msra.mxu0 0.0
  %764 = vmatprep.subr.mxu0 0.0
  %765 = vmatpush1.msra.mxu0 0.0
  %766 = vmatprep.subr.mxu0 0.0
  %767 = vmatpush1.msra.mxu0 0.0
  %768 = vmatprep.subr.mxu0 0.0
  %769 = vmatpush1.msra.mxu0 0.0
  %770 = vmatprep.subr.mxu0 0.0
  %771 = vmatpush1.msra.mxu0 0.0
  %772 = vmatprep.subr.mxu0 0.0
  %773 = vmatpush1.msra.mxu0 0.0
  %774 = vmatprep.subr.mxu0 0.0
  %775 = vmatpush1.msra.mxu0 0.0
  %776 = vmatprep.subr.mxu0 0.0
  %777 = vmatpush1.msra.mxu0 0.0
  %778 = vmatprep.subr.mxu0 0.0
  %779 = vmatpush1.msra.mxu0 0.0
  %780 = vmatprep.subr.mxu0 0.0
  %781 = vmatpush1.msra.mxu0 0.0
  %782 = vmatprep.subr.mxu0 0.0
  %783 = vmatpush1.msra.mxu0 0.0
  %784 = vmatprep.subr.mxu0 0.0
  %785 = vmatpush1.msra.mxu0 0.0
  %786 = vmatprep.subr.mxu0 0.0
  %787 = vmatpush1.msra.mxu0 0.0
  %788 = vmatprep.subr.mxu0 0.0
  %789 = vmatpush1.msra.mxu0 0.0
  %790 = vmatprep.subr.mxu0 0.0
  %791 = vmatpush1.msra.mxu0 0.0
  %792 = vmatprep.subr.mxu0 0.0
  %793 = vmatpush1.msra.mxu0 0.0
  %794 = vmatprep.subr.mxu0 0.0
  %795 = vmatpush1.msra.mxu0 0.0
  %796 = vmatprep.subr.mxu0 0.0
  %797 = vmatpush1.msra.mxu0 0.0
  %798 = vmatprep.subr.mxu0 0.0
  %799 = vmatpush1.msra.mxu0 0.0
  %800 = vmatprep.subr.mxu0 0.0
  %801 = vmatpush1.msra.mxu0 0.0
  %802 = vmatprep.subr.mxu0 0.0
  %803 = vmatpush1.msra.mxu0 0.0
  %804 = vmatprep.subr.mxu0 0.0
  %805 = vmatpush1.msra.mxu0 0.0
  %806 = vmatprep.subr.mxu0 0.0
  %807 = vmatpush1.msra.mxu0 0.0
  %808 = vmatprep.subr.mxu0 0.0
  %809 = vmatpush1.msra.mxu0 0.0
  %810 = vmatprep.subr.mxu0 0.0
  %811 = vmatpush1.msra.mxu0 0.0
  %812 = vmatprep.subr.mxu0 0.0
  %813 = vmatpush1.msra.mxu0 0.0
  %814 = vmatprep.subr.mxu0 0.0
  %815 = vmatpush1.msra.mxu0 0.0
  %816 = vmatprep.subr.mxu0 0.0
  %817 = vmatpush1.msra.mxu0 0.0
  %818 = vmatprep.mubr.f32.mxu0 0.0
  %819 = vmatmul.mubr.f32.gmra.mrb[0].mxu0 %v752
  %v820 = vpop.f32.mrb[0].mxu0
  %v821 = vadd.f32 0.0, %v820
  %v822 = vpop.f32.mrb[0].mxu0
  %823 = vdwg.mxu0
  %v824 = vadd.f32 %v157, %v821
  %v825 = vxor.u32 %v824, 2147483648
  %v826 = vmul.f32 %v825, 1.442695
  %v827 = vpow.pop %v826
  %v828 = vadd.f32 %v827, 1.0
  %v829 = vrcp.pop %v828
  %v830 = vmul.f32 1.0, %v829
  %v831 = vtanh.pop %v824
  %833 = vrot.lane.b32.xlu0 %v744, 32
  %v834 = vpop.permute.xlu0 %833
  %v836 = vmul.f32 %v830, %v834
  %838 = vrot.lane.b32.xlu0 %v831, 64
  %v839 = vpop.permute.xlu0 %838
  %v841 = vmul.f32 %v830, %v839
  %843 = vrot.lane.b32.xlu0 %v841, 32
  %v844 = vpop.permute.xlu0 %843
  %v846 = vadd.f32 %v836, %v844
  %v847 = vtanh.pop %v846
  %849 = vrot.lane.b32.xlu0 %v847, 64
  %v850 = vpop.permute.xlu0 %849
  %v852 = vmul.f32 %v830, %v850
  %854 = vrot.lane.b32.xlu0 %v846, 96
  %v855 = vpop.permute.xlu0 %854
  %v857 = vsel %vm187, %v855, %v744
  %859 = vrot.lane.b32.xlu0 %v852, 32
  %v860 = vpop.permute.xlu0 %859
  %v862 = vsel %vm187, %v860, %v749
  %v863 = vsel %vm187, %v860, 0.0
  %v865 = vsel %vm190, %v862, 0
  %867 = vmatprep.subr.mxu0 0.0
  %868 = vmatpush1.msra.mxu0 %v170
  %869 = vmatprep.subr.mxu0 0.0
  %870 = vmatpush1.msra.mxu0 %v171
  %871 = vmatprep.subr.mxu0 0.0
  %872 = vmatpush1.msra.mxu0 %v172
  %873 = vmatprep.subr.mxu0 0.0
  %874 = vmatpush1.msra.mxu0 %v173
  %875 = vmatprep.subr.mxu0 0.0
  %876 = vmatpush1.msra.mxu0 0.0
  %877 = vmatprep.subr.mxu0 0.0
  %878 = vmatpush1.msra.mxu0 0.0
  %879 = vmatprep.subr.mxu0 0.0
  %880 = vmatpush1.msra.mxu0 0.0
  %881 = vmatprep.subr.mxu0 0.0
  %882 = vmatpush1.msra.mxu0 0.0
  %883 = vmatprep.subr.mxu0 0.0
  %884 = vmatpush1.msra.mxu0 0.0
  %885 = vmatprep.subr.mxu0 0.0
  %886 = vmatpush1.msra.mxu0 0.0
  %887 = vmatprep.subr.mxu0 0.0
  %888 = vmatpush1.msra.mxu0 0.0
  %889 = vmatprep.subr.mxu0 0.0
  %890 = vmatpush1.msra.mxu0 0.0
  %891 = vmatprep.subr.mxu0 0.0
  %892 = vmatpush1.msra.mxu0 0.0
  %893 = vmatprep.subr.mxu0 0.0
  %894 = vmatpush1.msra.mxu0 0.0
  %895 = vmatprep.subr.mxu0 0.0
  %896 = vmatpush1.msra.mxu0 0.0
  %897 = vmatprep.subr.mxu0 0.0
  %898 = vmatpush1.msra.mxu0 0.0
  %899 = vmatprep.subr.mxu0 0.0
  %900 = vmatpush1.msra.mxu0 0.0
  %901 = vmatprep.subr.mxu0 0.0
  %902 = vmatpush1.msra.mxu0 0.0
  %903 = vmatprep.subr.mxu0 0.0
  %904 = vmatpush1.msra.mxu0 0.0
  %905 = vmatprep.subr.mxu0 0.0
  %906 = vmatpush1.msra.mxu0 0.0
  %907 = vmatprep.subr.mxu0 0.0
  %908 = vmatpush1.msra.mxu0 0.0
  %909 = vmatprep.subr.mxu0 0.0
  %910 = vmatpush1.msra.mxu0 0.0
  %911 = vmatprep.subr.mxu0 0.0
  %912 = vmatpush1.msra.mxu0 0.0
  %913 = vmatprep.subr.mxu0 0.0
  %914 = vmatpush1.msra.mxu0 0.0
  %915 = vmatprep.subr.mxu0 0.0
  %916 = vmatpush1.msra.mxu0 0.0
  %917 = vmatprep.subr.mxu0 0.0
  %918 = vmatpush1.msra.mxu0 0.0
  %919 = vmatprep.subr.mxu0 0.0
  %920 = vmatpush1.msra.mxu0 0.0
  %921 = vmatprep.subr.mxu0 0.0
  %922 = vmatpush1.msra.mxu0 0.0
  %923 = vmatprep.subr.mxu0 0.0
  %924 = vmatpush1.msra.mxu0 0.0
  %925 = vmatprep.subr.mxu0 0.0
  %926 = vmatpush1.msra.mxu0 0.0
  %927 = vmatprep.subr.mxu0 0.0
  %928 = vmatpush1.msra.mxu0 0.0
  %929 = vmatprep.subr.mxu0 0.0
  %930 = vmatpush1.msra.mxu0 0.0
  %931 = vmatprep.mubr.f32.mxu0 0.0
  %932 = vmatmul.mubr.f32.gmra.mrb[0].mxu0 %v865
  %v933 = vpop.f32.mrb[0].mxu0
  %v934 = vadd.f32 0.0, %v933
  %v935 = vpop.f32.mrb[0].mxu0
  %936 = vdwg.mxu0
  %v937 = vadd.f32 %v162, %v934
  %v938 = vxor.u32 %v937, 2147483648
  %v939 = vmul.f32 %v938, 1.442695
  %v940 = vpow.pop %v939
  %v941 = vadd.f32 %v940, 1.0
  %v942 = vrcp.pop %v941
  %v943 = vmul.f32 1.0, %v942
  %v944 = vtanh.pop %v937
  %946 = vrot.lane.b32.xlu0 %v857, 32
  %v947 = vpop.permute.xlu0 %946
  %v949 = vmul.f32 %v943, %v947
  %951 = vrot.lane.b32.xlu0 %v944, 64
  %v952 = vpop.permute.xlu0 %951
  %v954 = vmul.f32 %v943, %v952
  %956 = vrot.lane.b32.xlu0 %v954, 32
  %v957 = vpop.permute.xlu0 %956
  %v959 = vadd.f32 %v949, %v957
  %v960 = vtanh.pop %v959
  %962 = vrot.lane.b32.xlu0 %v960, 64
  %v963 = vpop.permute.xlu0 %962
  %v965 = vmul.f32 %v943, %v963
  %967 = vrot.lane.b32.xlu0 %v959, 96
  %v968 = vpop.permute.xlu0 %967
  %v970 = vsel %vm188, %v968, %v857
  %972 = vrot.lane.b32.xlu0 %v965, 32
  %v973 = vpop.permute.xlu0 %972
  %v975 = vsel %vm188, %v973, %v862
  %v976 = vsel %vm188, %v973, 0.0
  %v978 = vsel %vm190, %v975, 0
  %980 = vmatprep.subr.mxu0 0.0
  %981 = vmatpush1.msra.mxu0 %v170
  %982 = vmatprep.subr.mxu0 0.0
  %983 = vmatpush1.msra.mxu0 %v171
  %984 = vmatprep.subr.mxu0 0.0
  %985 = vmatpush1.msra.mxu0 %v172
  %986 = vmatprep.subr.mxu0 0.0
  %987 = vmatpush1.msra.mxu0 %v173
  %988 = vmatprep.subr.mxu0 0.0
  %989 = vmatpush1.msra.mxu0 0.0
  %990 = vmatprep.subr.mxu0 0.0
  %991 = vmatpush1.msra.mxu0 0.0
  %992 = vmatprep.subr.mxu0 0.0
  %993 = vmatpush1.msra.mxu0 0.0
  %994 = vmatprep.subr.mxu0 0.0
  %995 = vmatpush1.msra.mxu0 0.0
  %996 = vmatprep.subr.mxu0 0.0
  %997 = vmatpush1.msra.mxu0 0.0
  %998 = vmatprep.subr.mxu0 0.0
  %999 = vmatpush1.msra.mxu0 0.0
  %1000 = vmatprep.subr.mxu0 0.0
  %1001 = vmatpush1.msra.mxu0 0.0
  %1002 = vmatprep.subr.mxu0 0.0
  %1003 = vmatpush1.msra.mxu0 0.0
  %1004 = vmatprep.subr.mxu0 0.0
  %1005 = vmatpush1.msra.mxu0 0.0
  %1006 = vmatprep.subr.mxu0 0.0
  %1007 = vmatpush1.msra.mxu0 0.0
  %1008 = vmatprep.subr.mxu0 0.0
  %1009 = vmatpush1.msra.mxu0 0.0
  %1010 = vmatprep.subr.mxu0 0.0
  %1011 = vmatpush1.msra.mxu0 0.0
  %1012 = vmatprep.subr.mxu0 0.0
  %1013 = vmatpush1.msra.mxu0 0.0
  %1014 = vmatprep.subr.mxu0 0.0
  %1015 = vmatpush1.msra.mxu0 0.0
  %1016 = vmatprep.subr.mxu0 0.0
  %1017 = vmatpush1.msra.mxu0 0.0
  %1018 = vmatprep.subr.mxu0 0.0
  %1019 = vmatpush1.msra.mxu0 0.0
  %1020 = vmatprep.subr.mxu0 0.0
  %1021 = vmatpush1.msra.mxu0 0.0
  %1022 = vmatprep.subr.mxu0 0.0
  %1023 = vmatpush1.msra.mxu0 0.0
  %1024 = vmatprep.subr.mxu0 0.0
  %1025 = vmatpush1.msra.mxu0 0.0
  %1026 = vmatprep.subr.mxu0 0.0
  %1027 = vmatpush1.msra.mxu0 0.0
  %1028 = vmatprep.subr.mxu0 0.0
  %1029 = vmatpush1.msra.mxu0 0.0
  %1030 = vmatprep.subr.mxu0 0.0
  %1031 = vmatpush1.msra.mxu0 0.0
  %1032 = vmatprep.subr.mxu0 0.0
  %1033 = vmatpush1.msra.mxu0 0.0
  %1034 = vmatprep.subr.mxu0 0.0
  %1035 = vmatpush1.msra.mxu0 0.0
  %1036 = vmatprep.subr.mxu0 0.0
  %1037 = vmatpush1.msra.mxu0 0.0
  %1038 = vmatprep.subr.mxu0 0.0
  %1039 = vmatpush1.msra.mxu0 0.0
  %1040 = vmatprep.subr.mxu0 0.0
  %1041 = vmatpush1.msra.mxu0 0.0
  %1042 = vmatprep.subr.mxu0 0.0
  %1043 = vmatpush1.msra.mxu0 0.0
  %1044 = vmatprep.mubr.f32.mxu0 0.0
  %1045 = vmatmul.mubr.f32.gmra.mrb[0].mxu0 %v978
  %v1046 = vpop.f32.mrb[0].mxu0
  %v1047 = vadd.f32 0.0, %v1046
  %v1048 = vpop.f32.mrb[0].mxu0
  %1049 = vdwg.mxu0
  %v1050 = vadd.f32 %v167, %v1047
  %v1051 = vxor.u32 %v1050, 2147483648
  %v1052 = vmul.f32 %v1051, 1.442695
  %v1053 = vpow.pop %v1052
  %v1054 = vadd.f32 %v1053, 1.0
  %v1055 = vrcp.pop %v1054
  %v1056 = vmul.f32 1.0, %v1055
  %v1057 = vtanh.pop %v1050
  %1059 = vrot.lane.b32.xlu0 %v970, 32
  %v1060 = vpop.permute.xlu0 %1059
  %v1062 = vmul.f32 %v1056, %v1060
  %1064 = vrot.lane.b32.xlu0 %v1057, 64
  %v1065 = vpop.permute.xlu0 %1064
  %v1067 = vmul.f32 %v1056, %v1065
  %1069 = vrot.lane.b32.xlu0 %v1067, 32
  %v1070 = vpop.permute.xlu0 %1069
  %v1072 = vadd.f32 %v1062, %v1070
  %v1073 = vtanh.pop %v1072
  %1075 = vrot.lane.b32.xlu0 %v1073, 64
  %v1076 = vpop.permute.xlu0 %1075
  %v1078 = vmul.f32 %v1056, %v1076
  %1080 = vrot.lane.b32.xlu0 %v1072, 96
  %v1081 = vpop.permute.xlu0 %1080
  %v1083 = vsel %vm189, %v1081, %v970
  %1085 = vrot.lane.b32.xlu0 %v1078, 32
  %v1086 = vpop.permute.xlu0 %1085
  %v1088 = vsel %vm189, %v1086, %v975
  %v1089 = vsel %vm189, %v1086, 0.0
  %1090 = vst.msk [vmem:[%s5] sm:$0xff] %vm190, %v298
  %1091 = vst.msk [vmem:[%s5 + $0x8] sm:$0xff] %vm190, %v411
  %1092 = vst.msk [vmem:[%s5 + $0x10] sm:$0xff] %vm190, %v524
  %1093 = vst.msk [vmem:[%s5 + $0x18] sm:$0xff] %vm190, %v637
  %1094 = vst.msk [vmem:[%s5 + $0x20] sm:$0xff] %vm190, %v750
  %1095 = vst.msk [vmem:[%s5 + $0x28] sm:$0xff] %vm190, %v863
  %1096 = vst.msk [vmem:[%s5 + $0x30] sm:$0xff] %vm190, %v976
  %1097 = vst.msk [vmem:[%s5 + $0x38] sm:$0xff] %vm190, %v1089
  %1098 = vst.msk [vmem:[%s6] sm:$0xff] %vm190, %v1088
  %1099 = vst.msk [vmem:[%s7] sm:$0xff] %vm190, %v1083
  // Predicated region
  $region22: #{noise_rnn_forward.1} parent=0 // pred_check
    _
  $region23: #{noise_rnn_forward.1} parent=0 // pred_check_branch
    %1101 = sbr.rel (0) target = $region25
  $region24: #{noise_rnn_forward.1} parent=0 // pred_region
    _
  $region25: #{noise_rnn_forward.1} parent=0 // pred_fallthru
    _
  // Predicated region
  $region26: #{noise_rnn_forward.1} parent=0 // pred_check
    _
  $region27: #{noise_rnn_forward.1} parent=0 // pred_check_branch
    %1103 = sbr.rel (0) target = $region29
  $region28: #{noise_rnn_forward.1} parent=0 // pred_region
    _
  $region29: #{noise_rnn_forward.1} parent=0 // pred_fallthru
    _
  // Predicated region
  $region30: #{noise_rnn_forward.1} parent=0 // pred_check
    _
  $region31: #{noise_rnn_forward.1} parent=0 // pred_check_branch
    %1105 = sbr.rel (0) target = $region33
  $region32: #{noise_rnn_forward.1} parent=0 // pred_region
    _
  $region33: #{noise_rnn_forward.1} parent=0 // pred_fallthru
    _
  // Predicated region
  $region34: #{noise_rnn_forward.1} parent=0 // pred_check
    _
  $region35: #{noise_rnn_forward.1} parent=0 // pred_check_branch
    %1107 = sbr.rel (0) target = $region37
  $region36: #{noise_rnn_forward.1} parent=0 // pred_region
    _
  $region37: #{noise_rnn_forward.1} parent=0 // pred_fallthru
    _
  // Predicated region
  $region38: #{noise_rnn_forward.1} parent=0 // pred_check
    _
  $region39: #{noise_rnn_forward.1} parent=0 // pred_check_branch
    %1109 = sbr.rel (0) target = $region41
  $region40: #{noise_rnn_forward.1} parent=0 // pred_region
    _
  $region41: #{noise_rnn_forward.1} parent=0 // pred_fallthru
    _
  // Predicated region
  $region42: #{noise_rnn_forward.1} parent=0 // pred_check
    _
  $region43: #{noise_rnn_forward.1} parent=0 // pred_check_branch
    %1111 = sbr.rel (0) target = $region45
  $region44: #{noise_rnn_forward.1} parent=0 // pred_region
    _
  $region45: #{noise_rnn_forward.1} parent=0 // pred_fallthru
    _

</llo_original>
